<compile_context>
chip_gen: v7x
topology: tpu7x:2x2x1
jax: 0.10.0
libtpu: 0.0.40
codegen_flags: <defaults>
</compile_context>

<pallas_src>
import jax
import jax.numpy as jnp
import numpy as np
from jax.experimental import pallas as pl
from jax.experimental.pallas import tpu as pltpu

# TODO(synk): the allennlp Elmo biLM encoder and batch_to_ids character mapping are
# external pretrained components and are not reproduced here; the two ELMo
# representation layers are synthesized as kernel inputs instead.


def _round_up(x, m):
    return ((x + m - 1) // m) * m


def elmo_mix_mlp_kernel(l1_ref, l2_ref, w1_ref, w2_ref, b_ref, o_ref):
    # l1_ref, l2_ref: (TM, K) f32   ELMo layer row tiles (streamed from HBM once)
    # w1_ref, w2_ref: (K, E)  bf16  weight pre-scaled by gamma*softmax(lw)[i]
    # b_ref:          (1, E)  f32   bias (resident across the grid)
    # o_ref:          (TM, E) f32   output row tile
    l1 = l1_ref[...].astype(jnp.bfloat16)   # single cheap VPU cast per element
    l2 = l2_ref[...].astype(jnp.bfloat16)

    # Layer mix folded into the MXU: two bf16 dots, f32 accumulation.
    acc = jnp.dot(l1, w1_ref[...], preferred_element_type=jnp.float32)
    acc = acc + jnp.dot(l2, w2_ref[...], preferred_element_type=jnp.float32)

    o_ref[...] = jnp.maximum(acc + b_ref[...], 0.0).astype(o_ref.dtype)


def elmo_embedding_forward(layer1, layer2, layer_weight, gamma, w, b, *, tm=1024):
    """layer1, layer2: (B, S, 1024); layer_weight: (2,); gamma: (1,);
    w: (1024, E); b: (E,).  Returns (B, S, E) float32."""
    B, S, K = layer1.shape
    E = w.shape[1]
    M = B * S

    # Fold gamma * softmax(layer_weight) into the MLP weight (f32 scale,
    # single bf16 cast) -> the mix runs on the MXU, not the VPU.
    lw = jax.nn.softmax(layer_weight.astype(jnp.float32))
    g = gamma.astype(jnp.float32).reshape(())
    wf = w.astype(jnp.float32)
    w1 = (g * lw[0] * wf).astype(jnp.bfloat16)
    w2 = (g * lw[1] * wf).astype(jnp.bfloat16)
    bk = b.reshape(1, E).astype(jnp.float32)

    # Free reshapes only: no cast, no pad -> each layer is read from HBM once.
    l1 = layer1.reshape(M, K)
    l2 = layer2.reshape(M, K)

    # Row tile: cap at `tm`, keep sublane-aligned; ragged last tile is masked
    # by Pallas (partial reads / masked writes), no wrapper-side padding copy.
    TM = min(tm, _round_up(M, 8))
    grid = (pl.cdiv(M, TM),)

    cost = pl.CostEstimate(
        flops=4 * M * K * E,                       # two K=1024 matmuls per row
        transcendentals=0,
        bytes_accessed=2 * M * K * 4 + M * E * 4 + 2 * K * E * 2 + E * 4,
    )

    out = pl.pallas_call(
        elmo_mix_mlp_kernel,
        out_shape=jax.ShapeDtypeStruct((M, E), jnp.float32),
        grid_spec=pltpu.PrefetchScalarGridSpec(
            num_scalar_prefetch=0,
            grid=grid,
            in_specs=[
                pl.BlockSpec((TM, K), lambda i: (i, 0)),   # layer1 row tile
                pl.BlockSpec((TM, K), lambda i: (i, 0)),   # layer2 row tile
                pl.BlockSpec((K, E), lambda i: (0, 0)),    # w1 (resident)
                pl.BlockSpec((K, E), lambda i: (0, 0)),    # w2 (resident)
                pl.BlockSpec((1, E), lambda i: (0, 0)),    # bias (resident)
            ],
            out_specs=pl.BlockSpec((TM, E), lambda i: (i, 0)),
        ),
        compiler_params=pltpu.CompilerParams(
            dimension_semantics=("parallel",),
            # TM=1024 f32 tiles: 2 layers x 2 bufs x 4 MiB + out + weights
            # ~= 18 MiB; 48 MiB is safe on v5e/v6e (128 MiB) and v7x (64 MiB).
            vmem_limit_bytes=48 * 1024 * 1024,
        ),
        cost_estimate=cost,
    )(l1, l2, w1, w2, bk)

    return out.reshape(B, S, E)


def reference_forward(layer1, layer2, layer_weight, gamma, w, b):
    lw = jax.nn.softmax(layer_weight, axis=0)
    final_layer = gamma[0] * (layer1 * lw[0] + layer2 * lw[1])
    return jax.nn.relu(jnp.einsum("bsk,ke->bse", final_layer, w) + b)


if __name__ == "__main__":
    # Small shapes consistent with the module: ELMo hidden = 1024 (fixed by the
    # pretrained biLM), elmo_emb_size = 128, batch = 2, seq = 8.
    B, S, K, E = 2, 8, 1024, 128

    key = jax.random.PRNGKey(0)
    k1, k2, k3, k4 = jax.random.split(key, 4)

    # Synthetic ELMo representations (stand-ins for self.elmo(character_ids)).
    layer1 = jax.random.normal(k1, (B, S, K), dtype=jnp.float32)
    layer2 = jax.random.normal(k2, (B, S, K), dtype=jnp.float32)

    # Deterministic parameter init matching the module's __init__ shapes.
    layer_weight = jnp.array([0.5, 0.5], dtype=jnp.float32)   # nn.Parameter([0.5, 0.5])
    gamma = jnp.ones((1,), dtype=jnp.float32)                 # nn.Parameter(torch.ones(1))
    w = jax.random.normal(k3, (K, E), dtype=jnp.float32) * (1.0 / np.sqrt(K))
    b = jax.random.normal(k4, (E,), dtype=jnp.float32) * 0.01

    out = elmo_embedding_forward(layer1, layer2, layer_weight, gamma, w, b)
    out = jax.block_until_ready(out)

    ref = reference_forward(layer1, layer2, layer_weight, gamma, w, b)
    # bf16 activations / weights inside the kernel -> loosened tolerance.
    np.testing.assert_allclose(np.asarray(out), np.asarray(ref), rtol=2e-2, atol=2e-2)

    print("KERNEL_OK")
</pallas_src>

<mosaic_0001>
module attributes {stable_mosaic.version = 11 : i64} {
  func.func @elmo_mix_mlp_kernel(%arg0: i32, %arg1: memref<16x1024xf32, #tpu.memory_space<vmem>>, %arg2: memref<16x1024xf32, #tpu.memory_space<vmem>>, %arg3: memref<1024x128xbf16, #tpu.memory_space<vmem>>, %arg4: memref<1024x128xbf16, #tpu.memory_space<vmem>>, %arg5: memref<1x128xf32, #tpu.memory_space<vmem>>, %arg6: memref<16x128xf32, #tpu.memory_space<vmem>>) attributes {dimension_semantics = [#tpu.dimension_semantics<parallel>], iteration_bounds = array<i64: 1>, scalar_prefetch = 0 : i64, scratch_operands = 0 : i64, tpu.core_type = #tpu.core_type<tc>, window_params = [{transform_indices = @transform_0, window_bounds = array<i64: 16, 1024>}, {transform_indices = @transform_1, window_bounds = array<i64: 16, 1024>}, {pipeline_mode = #tpu.pipeline_mode<synchronous>, transform_indices = @transform_2, window_bounds = array<i64: 1024, 128>}, {pipeline_mode = #tpu.pipeline_mode<synchronous>, transform_indices = @transform_3, window_bounds = array<i64: 1024, 128>}, {pipeline_mode = #tpu.pipeline_mode<synchronous>, transform_indices = @transform_4, window_bounds = array<i64: 1, 128>}, {transform_indices = @transform_5, window_bounds = array<i64: 16, 128>}]} {
    %c0 = arith.constant 0 : index
    %c0_0 = arith.constant 0 : index
    %0 = vector.load %arg1[%c0, %c0_0] : memref<16x1024xf32, #tpu.memory_space<vmem>>, vector<16x1024xf32>
    %1 = arith.truncf %0 : vector<16x1024xf32> to vector<16x1024xbf16>
    %c0_1 = arith.constant 0 : index
    %c0_2 = arith.constant 0 : index
    %2 = vector.load %arg2[%c0_1, %c0_2] : memref<16x1024xf32, #tpu.memory_space<vmem>>, vector<16x1024xf32>
    %3 = arith.truncf %2 : vector<16x1024xf32> to vector<16x1024xbf16>
    %c0_3 = arith.constant 0 : index
    %c0_4 = arith.constant 0 : index
    %4 = vector.load %arg3[%c0_3, %c0_4] : memref<1024x128xbf16, #tpu.memory_space<vmem>>, vector<1024x128xbf16>
    %cst = arith.constant dense<0.000000e+00> : vector<16x128xf32>
    %5 = tpu.matmul %1, %4, %cst {dimension_numbers = #tpu.dot_dimension_numbers<[1], [0], [0], [1], [0, 0, 1, 1], [], []>} : vector<16x1024xbf16>, vector<1024x128xbf16>, vector<16x128xf32> -> vector<16x128xf32>
    %c0_5 = arith.constant 0 : index
    %c0_6 = arith.constant 0 : index
    %6 = vector.load %arg4[%c0_5, %c0_6] : memref<1024x128xbf16, #tpu.memory_space<vmem>>, vector<1024x128xbf16>
    %cst_7 = arith.constant dense<0.000000e+00> : vector<16x128xf32>
    %7 = tpu.matmul %3, %6, %cst_7 {dimension_numbers = #tpu.dot_dimension_numbers<[1], [0], [0], [1], [0, 0, 1, 1], [], []>} : vector<16x1024xbf16>, vector<1024x128xbf16>, vector<16x128xf32> -> vector<16x128xf32>
    %8 = arith.addf %5, %7 : vector<16x128xf32>
    %c0_8 = arith.constant 0 : index
    %c0_9 = arith.constant 0 : index
    %9 = vector.load %arg5[%c0_8, %c0_9] : memref<1x128xf32, #tpu.memory_space<vmem>>, vector<1x128xf32>
    %10 = vector.broadcast %9 : vector<1x128xf32> to vector<16x128xf32>
    %11 = arith.addf %8, %10 : vector<16x128xf32>
    %cst_10 = arith.constant 0.000000e+00 : f32
    %12 = vector.broadcast %cst_10 : f32 to vector<16x128xf32>
    %13 = arith.maximumf %11, %12 : vector<16x128xf32>
    %c0_11 = arith.constant 0 : index
    %c0_12 = arith.constant 0 : index
    %14 = vector.load %arg6[%c0_11, %c0_12] : memref<16x128xf32, #tpu.memory_space<vmem>>, vector<16x128xf32>
    tpu.vector_store %arg6[%c0_11, %c0_12], %13 {strides = array<i32>} : memref<16x128xf32, #tpu.memory_space<vmem>>, vector<16x128xf32>,
    return
  }
  func.func @transform_0(%arg0: i32) -> (i32, i32) {
    %c0_i32 = arith.constant 0 : i32
    %c0_i32_0 = arith.constant 0 : i32
    return %arg0, %c0_i32 : i32, i32
  }
  func.func @transform_1(%arg0: i32) -> (i32, i32) {
    %c0_i32 = arith.constant 0 : i32
    %c0_i32_0 = arith.constant 0 : i32
    return %arg0, %c0_i32 : i32, i32
  }
  func.func @transform_2(%arg0: i32) -> (i32, i32) {
    %c0_i32 = arith.constant 0 : i32
    %c0_i32_0 = arith.constant 0 : i32
    %c0_i32_1 = arith.constant 0 : i32
    return %c0_i32, %c0_i32_0 : i32, i32
  }
  func.func @transform_3(%arg0: i32) -> (i32, i32) {
    %c0_i32 = arith.constant 0 : i32
    %c0_i32_0 = arith.constant 0 : i32
    %c0_i32_1 = arith.constant 0 : i32
    return %c0_i32, %c0_i32_0 : i32, i32
  }
  func.func @transform_4(%arg0: i32) -> (i32, i32) {
    %c0_i32 = arith.constant 0 : i32
    %c0_i32_0 = arith.constant 0 : i32
    %c0_i32_1 = arith.constant 0 : i32
    return %c0_i32, %c0_i32_0 : i32, i32
  }
  func.func @transform_5(%arg0: i32) -> (i32, i32) {
    %c0_i32 = arith.constant 0 : i32
    %c0_i32_0 = arith.constant 0 : i32
    return %arg0, %c0_i32 : i32, i32
  }
}

</mosaic_0001>

<llo_original>
// kernel: tpu_custom_call.1
$region0: #{tpu_custom_call.1}
  #allocation0 [shape = 'u32[]', space=smem, size = 0x4, offset = 0x4, fixed_abs, tag = 'smem constant byte address 0x4 - core index']
  #allocation1 [shape = 'u32[144,128]{1,0:T(1,128)}', space=vmem, size = 0x12000, scoped, tag = 'internal scratch']
  %s0 = inlined_call_operand.hbm [shape: f32[16,1024], index: 0, kind: input, shape index: {}]
  %s1 = inlined_call_operand.hbm [shape: f32[16,1024], index: 1, kind: input, shape index: {}]
  %s2 = inlined_call_operand.hbm [shape: bf16[1024,128], index: 2, kind: input, shape index: {}]
  %s3 = inlined_call_operand.hbm [shape: bf16[1024,128], index: 3, kind: input, shape index: {}]
  %s4 = inlined_call_operand.vmem [shape: f32[1,128], index: 4, kind: input, shape index: {}]
  %s5 = inlined_call_operand.hbm [shape: f32[16,128], index: 5, kind: output, shape index: {}]
  %s6 = sld [smem:[#allocation0]]
  $region46: #{tpu_custom_call.1} parent=0
    _
  %s8 = ssub.s32 1, %s6
  %s9 = scalar_select 0, %s8, %s6
  $region1: #{tpu_custom_call.1} parent=0
    #allocation2 [shape = 'u8[65536]{0}', space=vmem, size = 0x10000, scoped, tag = 'input window, operand 0, single buffered']
    #allocation3 [shape = 's32[1]{0}', space=sflag, size = 0x4, scoped, tag = 'scoped memory for tpu_custom_call.1']
    #allocation4 [shape = 's32[1]{0}', space=sflag, size = 0x4, scoped, tag = 'scoped memory for tpu_custom_call.1']
    #allocation5 [shape = 'u8[65536]{0}', space=vmem, size = 0x10000, scoped, tag = 'input window, operand 1, single buffered']
    #allocation6 [shape = 's32[1]{0}', space=sflag, size = 0x4, scoped, tag = 'scoped memory for tpu_custom_call.1']
    #allocation7 [shape = 'u8[262144]{0}', space=vmem, size = 0x40000, scoped, tag = 'input window, operand 2, single buffered']
    #allocation8 [shape = 'u8[262144]{0}', space=vmem, size = 0x40000, scoped, tag = 'input window, operand 3, single buffered']
    #allocation9 [shape = 's32[1]{0}', space=sflag, size = 0x4, scoped, tag = 'scoped memory for tpu_custom_call.1']
    #allocation10 [shape = 'u8[8192]{0}', space=vmem, size = 0x2000, scoped, tag = 'output window, operand 0, single buffered']
    %10 = vsyncpa [#allocation3], 0
    %11 = vsyncpa [#allocation6], 0
    %12 = vsyncpa [#allocation9], 0
    %13 = vsyncpa [#allocation4], 0
    // Predicated region
    $region2: #{tpu_custom_call.1} parent=1 // pred_check
      _
    $region3: #{tpu_custom_call.1} parent=1 // pred_check_branch
      %15 = sbr.rel (0) target = $region5
    $region4: #{tpu_custom_call.1} parent=1 // pred_region
      %s17 = ssub.s32 2048, 2048
      %18 = vsyncadd [#allocation3], %s17
      %s19 = sshll.u32 [#allocation2], 4
      %s20 = int_to_ptr.vmem [resolvable:$true] %s19
      %25 = dma.hbm_to_vmem [thread:$0]  %s0, 2048, %s20, [#allocation3], 1024, 1024, 64
    $region5: #{tpu_custom_call.1} parent=1 // pred_fallthru
      _
    // Predicated region
    $region6: #{tpu_custom_call.1} parent=1 // pred_check
      _
    $region7: #{tpu_custom_call.1} parent=1 // pred_check_branch
      %27 = sbr.rel (0) target = $region9
    $region8: #{tpu_custom_call.1} parent=1 // pred_region
      %s29 = ssub.s32 2048, 2048
      %30 = vsyncadd [#allocation6], %s29
      %s31 = sshll.u32 [#allocation5], 4
      %s32 = int_to_ptr.vmem [resolvable:$true] %s31
      %37 = dma.hbm_to_vmem [thread:$0]  %s1, 2048, %s32, [#allocation6], 1024, 1024, 64
    $region9: #{tpu_custom_call.1} parent=1 // pred_fallthru
      _
    // Predicated region
    $region10: #{tpu_custom_call.1} parent=1 // pred_check
      _
    $region11: #{tpu_custom_call.1} parent=1 // pred_check_branch
      %39 = sbr.rel (0) target = $region13
    $region12: #{tpu_custom_call.1} parent=1 // pred_region
      %s41 = ssub.s32 8192, 8192
      %42 = vsyncadd [#allocation6], %s41
      %s43 = sshll.u32 [#allocation7], 4
      %s44 = int_to_ptr.vmem [resolvable:$true] %s43
      %49 = dma.hbm_to_vmem [thread:$0]  %s2, 8192, %s44, [#allocation6], 64, 64, 4
    $region13: #{tpu_custom_call.1} parent=1 // pred_fallthru
      _
    // Predicated region
    $region14: #{tpu_custom_call.1} parent=1 // pred_check
      _
    $region15: #{tpu_custom_call.1} parent=1 // pred_check_branch
      %51 = sbr.rel (0) target = $region17
    $region16: #{tpu_custom_call.1} parent=1 // pred_region
      %s53 = ssub.s32 8192, 8192
      %54 = vsyncadd [#allocation9], %s53
      %s55 = sshll.u32 [#allocation8], 4
      %s56 = int_to_ptr.vmem [resolvable:$true] %s55
      %61 = dma.hbm_to_vmem [thread:$0]  %s3, 8192, %s56, [#allocation9], 64, 64, 4
    $region17: #{tpu_custom_call.1} parent=1 // pred_fallthru
      _
    // Predicated region
    $region18: #{tpu_custom_call.1} parent=1 // pred_check
      _
    $region19: #{tpu_custom_call.1} parent=1 // pred_check_branch
      %63 = sbr.rel (0) target = $region21
    $region20: #{tpu_custom_call.1} parent=1 // pred_region
      _
    $region21: #{tpu_custom_call.1} parent=1 // pred_fallthru
      _
    // Predicated region
    $region22: #{tpu_custom_call.1} parent=1 // pred_check
      _
    $region23: #{tpu_custom_call.1} parent=1 // pred_check_branch
      %65 = sbr.rel (0) target = $region25
    $region24: #{tpu_custom_call.1} parent=1 // pred_region
      %66 = dma.done [#allocation3], 2048
    $region25: #{tpu_custom_call.1} parent=1 // pred_fallthru
      _
    // Predicated region
    $region26: #{tpu_custom_call.1} parent=1 // pred_check
      _
    $region27: #{tpu_custom_call.1} parent=1 // pred_check_branch
      %68 = sbr.rel (0) target = $region29
    $region28: #{tpu_custom_call.1} parent=1 // pred_region
      %69 = dma.done [#allocation6], 2048
    $region29: #{tpu_custom_call.1} parent=1 // pred_fallthru
      _
    // Predicated region
    $region30: #{tpu_custom_call.1} parent=1 // pred_check
      _
    $region31: #{tpu_custom_call.1} parent=1 // pred_check_branch
      %71 = sbr.rel (0) target = $region33
    $region32: #{tpu_custom_call.1} parent=1 // pred_region
      %72 = dma.done [#allocation6], 8192
    $region33: #{tpu_custom_call.1} parent=1 // pred_fallthru
      _
    // Predicated region
    $region34: #{tpu_custom_call.1} parent=1 // pred_check
      _
    $region35: #{tpu_custom_call.1} parent=1 // pred_check_branch
      %74 = sbr.rel (0) target = $region37
    $region36: #{tpu_custom_call.1} parent=1 // pred_region
      %75 = dma.done [#allocation9], 8192
    $region37: #{tpu_custom_call.1} parent=1 // pred_fallthru
      _
    %v77 = vld [vmem:[#allocation2] sm:$0xff]
    %v78 = vld [vmem:[#allocation2 + $0x8] sm:$0xff]
    %v79 = vld [vmem:[#allocation2 + $0x10] sm:$0xff]
    %v80 = vld [vmem:[#allocation2 + $0x18] sm:$0xff]
    %v81 = vld [vmem:[#allocation2 + $0x20] sm:$0xff]
    %v82 = vld [vmem:[#allocation2 + $0x28] sm:$0xff]
    %v83 = vld [vmem:[#allocation2 + $0x30] sm:$0xff]
    %v84 = vld [vmem:[#allocation2 + $0x38] sm:$0xff]
    %v85 = vld [vmem:[#allocation2 + $0x40] sm:$0xff]
    %v86 = vld [vmem:[#allocation2 + $0x48] sm:$0xff]
    %v87 = vld [vmem:[#allocation2 + $0x50] sm:$0xff]
    %v88 = vld [vmem:[#allocation2 + $0x58] sm:$0xff]
    %v89 = vld [vmem:[#allocation2 + $0x60] sm:$0xff]
    %v90 = vld [vmem:[#allocation2 + $0x68] sm:$0xff]
    %v91 = vld [vmem:[#allocation2 + $0x70] sm:$0xff]
    %v92 = vld [vmem:[#allocation2 + $0x78] sm:$0xff]
    %v93 = vpack.c.bf16 %v85, %v77
    %v94 = vpack.c.bf16 %v86, %v78
    %v95 = vpack.c.bf16 %v87, %v79
    %v96 = vpack.c.bf16 %v88, %v80
    %v97 = vpack.c.bf16 %v89, %v81
    %v98 = vpack.c.bf16 %v90, %v82
    %v99 = vpack.c.bf16 %v91, %v83
    %v100 = vpack.c.bf16 %v92, %v84
    %v101 = vld [vmem:[#allocation5] sm:$0xff]
    %v102 = vld [vmem:[#allocation5 + $0x8] sm:$0xff]
    %v103 = vld [vmem:[#allocation5 + $0x10] sm:$0xff]
    %v104 = vld [vmem:[#allocation5 + $0x18] sm:$0xff]
    %v105 = vld [vmem:[#allocation5 + $0x20] sm:$0xff]
    %v106 = vld [vmem:[#allocation5 + $0x28] sm:$0xff]
    %v107 = vld [vmem:[#allocation5 + $0x30] sm:$0xff]
    %v108 = vld [vmem:[#allocation5 + $0x38] sm:$0xff]
    %v109 = vld [vmem:[#allocation5 + $0x40] sm:$0xff]
    %v110 = vld [vmem:[#allocation5 + $0x48] sm:$0xff]
    %v111 = vld [vmem:[#allocation5 + $0x50] sm:$0xff]
    %v112 = vld [vmem:[#allocation5 + $0x58] sm:$0xff]
    %v113 = vld [vmem:[#allocation5 + $0x60] sm:$0xff]
    %v114 = vld [vmem:[#allocation5 + $0x68] sm:$0xff]
    %v115 = vld [vmem:[#allocation5 + $0x70] sm:$0xff]
    %v116 = vld [vmem:[#allocation5 + $0x78] sm:$0xff]
    %v117 = vpack.c.bf16 %v109, %v101
    %v118 = vpack.c.bf16 %v110, %v102
    %v119 = vpack.c.bf16 %v111, %v103
    %v120 = vpack.c.bf16 %v112, %v104
    %v121 = vpack.c.bf16 %v113, %v105
    %v122 = vpack.c.bf16 %v114, %v106
    %v123 = vpack.c.bf16 %v115, %v107
    %v124 = vpack.c.bf16 %v116, %v108
    %v125 = vld [vmem:[#allocation7] sm:$0xf]
    %v126 = vld [vmem:[#allocation7 + $0x4] sm:$0xf]
    %v127 = vld [vmem:[#allocation7 + $0x8] sm:$0xf]
    %v128 = vld [vmem:[#allocation7 + $0xc] sm:$0xf]
    %v129 = vld [vmem:[#allocation7 + $0x10] sm:$0xf]
    %v130 = vld [vmem:[#allocation7 + $0x14] sm:$0xf]
    %v131 = vld [vmem:[#allocation7 + $0x18] sm:$0xf]
    %v132 = vld [vmem:[#allocation7 + $0x1c] sm:$0xf]
    %v133 = vld [vmem:[#allocation7 + $0x20] sm:$0xf]
    %v134 = vld [vmem:[#allocation7 + $0x24] sm:$0xf]
    %v135 = vld [vmem:[#allocation7 + $0x28] sm:$0xf]
    %v136 = vld [vmem:[#allocation7 + $0x2c] sm:$0xf]
    %v137 = vld [vmem:[#allocation7 + $0x30] sm:$0xf]
    %v138 = vld [vmem:[#allocation7 + $0x34] sm:$0xf]
    %v139 = vld [vmem:[#allocation7 + $0x38] sm:$0xf]
    %v140 = vld [vmem:[#allocation7 + $0x3c] sm:$0xf]
    %v141 = vld [vmem:[#allocation7 + $0x40] sm:$0xf]
    %v142 = vld [vmem:[#allocation7 + $0x44] sm:$0xf]
    %v143 = vld [vmem:[#allocation7 + $0x48] sm:$0xf]
    %v144 = vld [vmem:[#allocation7 + $0x4c] sm:$0xf]
    %v145 = vld [vmem:[#allocation7 + $0x50] sm:$0xf]
    %v146 = vld [vmem:[#allocation7 + $0x54] sm:$0xf]
    %v147 = vld [vmem:[#allocation7 + $0x58] sm:$0xf]
    %v148 = vld [vmem:[#allocation7 + $0x5c] sm:$0xf]
    %v149 = vld [vmem:[#allocation7 + $0x60] sm:$0xf]
    %v150 = vld [vmem:[#allocation7 + $0x64] sm:$0xf]
    %v151 = vld [vmem:[#allocation7 + $0x68] sm:$0xf]
    %v152 = vld [vmem:[#allocation7 + $0x6c] sm:$0xf]
    %v153 = vld [vmem:[#allocation7 + $0x70] sm:$0xf]
    %v154 = vld [vmem:[#allocation7 + $0x74] sm:$0xf]
    %v155 = vld [vmem:[#allocation7 + $0x78] sm:$0xf]
    %v156 = vld [vmem:[#allocation7 + $0x7c] sm:$0xf]
    %v157 = vld [vmem:[#allocation7 + $0x80] sm:$0xf]
    %v158 = vld [vmem:[#allocation7 + $0x84] sm:$0xf]
    %v159 = vld [vmem:[#allocation7 + $0x88] sm:$0xf]
    %v160 = vld [vmem:[#allocation7 + $0x8c] sm:$0xf]
    %v161 = vld [vmem:[#allocation7 + $0x90] sm:$0xf]
    %v162 = vld [vmem:[#allocation7 + $0x94] sm:$0xf]
    %v163 = vld [vmem:[#allocation7 + $0x98] sm:$0xf]
    %v164 = vld [vmem:[#allocation7 + $0x9c] sm:$0xf]
    %v165 = vld [vmem:[#allocation7 + $0xa0] sm:$0xf]
    %v166 = vld [vmem:[#allocation7 + $0xa4] sm:$0xf]
    %v167 = vld [vmem:[#allocation7 + $0xa8] sm:$0xf]
    %v168 = vld [vmem:[#allocation7 + $0xac] sm:$0xf]
    %v169 = vld [vmem:[#allocation7 + $0xb0] sm:$0xf]
    %v170 = vld [vmem:[#allocation7 + $0xb4] sm:$0xf]
    %v171 = vld [vmem:[#allocation7 + $0xb8] sm:$0xf]
    %v172 = vld [vmem:[#allocation7 + $0xbc] sm:$0xf]
    %v173 = vld [vmem:[#allocation7 + $0xc0] sm:$0xf]
    %v174 = vld [vmem:[#allocation7 + $0xc4] sm:$0xf]
    %v175 = vld [vmem:[#allocation7 + $0xc8] sm:$0xf]
    %v176 = vld [vmem:[#allocation7 + $0xcc] sm:$0xf]
    %v177 = vld [vmem:[#allocation7 + $0xd0] sm:$0xf]
    %v178 = vld [vmem:[#allocation7 + $0xd4] sm:$0xf]
    %v179 = vld [vmem:[#allocation7 + $0xd8] sm:$0xf]
    %v180 = vld [vmem:[#allocation7 + $0xdc] sm:$0xf]
    %v181 = vld [vmem:[#allocation7 + $0xe0] sm:$0xf]
    %v182 = vld [vmem:[#allocation7 + $0xe4] sm:$0xf]
    %v183 = vld [vmem:[#allocation7 + $0xe8] sm:$0xf]
    %v184 = vld [vmem:[#allocation7 + $0xec] sm:$0xf]
    %v185 = vld [vmem:[#allocation7 + $0xf0] sm:$0xf]
    %v186 = vld [vmem:[#allocation7 + $0xf4] sm:$0xf]
    %v187 = vld [vmem:[#allocation7 + $0xf8] sm:$0xf]
    %v188 = vld [vmem:[#allocation7 + $0xfc] sm:$0xf]
    %v189 = vld [vmem:[#allocation7 + $0x100] sm:$0xf]
    %v190 = vld [vmem:[#allocation7 + $0x104] sm:$0xf]
    %v191 = vld [vmem:[#allocation7 + $0x108] sm:$0xf]
    %v192 = vld [vmem:[#allocation7 + $0x10c] sm:$0xf]
    %v193 = vld [vmem:[#allocation7 + $0x110] sm:$0xf]
    %v194 = vld [vmem:[#allocation7 + $0x114] sm:$0xf]
    %v195 = vld [vmem:[#allocation7 + $0x118] sm:$0xf]
    %v196 = vld [vmem:[#allocation7 + $0x11c] sm:$0xf]
    %v197 = vld [vmem:[#allocation7 + $0x120] sm:$0xf]
    %v198 = vld [vmem:[#allocation7 + $0x124] sm:$0xf]
    %v199 = vld [vmem:[#allocation7 + $0x128] sm:$0xf]
    %v200 = vld [vmem:[#allocation7 + $0x12c] sm:$0xf]
    %v201 = vld [vmem:[#allocation7 + $0x130] sm:$0xf]
    %v202 = vld [vmem:[#allocation7 + $0x134] sm:$0xf]
    %v203 = vld [vmem:[#allocation7 + $0x138] sm:$0xf]
    %v204 = vld [vmem:[#allocation7 + $0x13c] sm:$0xf]
    %v205 = vld [vmem:[#allocation7 + $0x140] sm:$0xf]
    %v206 = vld [vmem:[#allocation7 + $0x144] sm:$0xf]
    %v207 = vld [vmem:[#allocation7 + $0x148] sm:$0xf]
    %v208 = vld [vmem:[#allocation7 + $0x14c] sm:$0xf]
    %v209 = vld [vmem:[#allocation7 + $0x150] sm:$0xf]
    %v210 = vld [vmem:[#allocation7 + $0x154] sm:$0xf]
    %v211 = vld [vmem:[#allocation7 + $0x158] sm:$0xf]
    %v212 = vld [vmem:[#allocation7 + $0x15c] sm:$0xf]
    %v213 = vld [vmem:[#allocation7 + $0x160] sm:$0xf]
    %v214 = vld [vmem:[#allocation7 + $0x164] sm:$0xf]
    %v215 = vld [vmem:[#allocation7 + $0x168] sm:$0xf]
    %v216 = vld [vmem:[#allocation7 + $0x16c] sm:$0xf]
    %v217 = vld [vmem:[#allocation7 + $0x170] sm:$0xf]
    %v218 = vld [vmem:[#allocation7 + $0x174] sm:$0xf]
    %v219 = vld [vmem:[#allocation7 + $0x178] sm:$0xf]
    %v220 = vld [vmem:[#allocation7 + $0x17c] sm:$0xf]
    %v221 = vld [vmem:[#allocation7 + $0x180] sm:$0xf]
    %v222 = vld [vmem:[#allocation7 + $0x184] sm:$0xf]
    %v223 = vld [vmem:[#allocation7 + $0x188] sm:$0xf]
    %v224 = vld [vmem:[#allocation7 + $0x18c] sm:$0xf]
    %v225 = vld [vmem:[#allocation7 + $0x190] sm:$0xf]
    %v226 = vld [vmem:[#allocation7 + $0x194] sm:$0xf]
    %v227 = vld [vmem:[#allocation7 + $0x198] sm:$0xf]
    %v228 = vld [vmem:[#allocation7 + $0x19c] sm:$0xf]
    %v229 = vld [vmem:[#allocation7 + $0x1a0] sm:$0xf]
    %v230 = vld [vmem:[#allocation7 + $0x1a4] sm:$0xf]
    %v231 = vld [vmem:[#allocation7 + $0x1a8] sm:$0xf]
    %v232 = vld [vmem:[#allocation7 + $0x1ac] sm:$0xf]
    %v233 = vld [vmem:[#allocation7 + $0x1b0] sm:$0xf]
    %v234 = vld [vmem:[#allocation7 + $0x1b4] sm:$0xf]
    %v235 = vld [vmem:[#allocation7 + $0x1b8] sm:$0xf]
    %v236 = vld [vmem:[#allocation7 + $0x1bc] sm:$0xf]
    %v237 = vld [vmem:[#allocation7 + $0x1c0] sm:$0xf]
    %v238 = vld [vmem:[#allocation7 + $0x1c4] sm:$0xf]
    %v239 = vld [vmem:[#allocation7 + $0x1c8] sm:$0xf]
    %v240 = vld [vmem:[#allocation7 + $0x1cc] sm:$0xf]
    %v241 = vld [vmem:[#allocation7 + $0x1d0] sm:$0xf]
    %v242 = vld [vmem:[#allocation7 + $0x1d4] sm:$0xf]
    %v243 = vld [vmem:[#allocation7 + $0x1d8] sm:$0xf]
    %v244 = vld [vmem:[#allocation7 + $0x1dc] sm:$0xf]
    %v245 = vld [vmem:[#allocation7 + $0x1e0] sm:$0xf]
    %v246 = vld [vmem:[#allocation7 + $0x1e4] sm:$0xf]
    %v247 = vld [vmem:[#allocation7 + $0x1e8] sm:$0xf]
    %v248 = vld [vmem:[#allocation7 + $0x1ec] sm:$0xf]
    %v249 = vld [vmem:[#allocation7 + $0x1f0] sm:$0xf]
    %v250 = vld [vmem:[#allocation7 + $0x1f4] sm:$0xf]
    %v251 = vld [vmem:[#allocation7 + $0x1f8] sm:$0xf]
    %v252 = vld [vmem:[#allocation7 + $0x1fc] sm:$0xf]
    %v253 = vld [vmem:[#allocation8] sm:$0xf]
    %v254 = vld [vmem:[#allocation8 + $0x4] sm:$0xf]
    %v255 = vld [vmem:[#allocation8 + $0x8] sm:$0xf]
    %v256 = vld [vmem:[#allocation8 + $0xc] sm:$0xf]
    %v257 = vld [vmem:[#allocation8 + $0x10] sm:$0xf]
    %v258 = vld [vmem:[#allocation8 + $0x14] sm:$0xf]
    %v259 = vld [vmem:[#allocation8 + $0x18] sm:$0xf]
    %v260 = vld [vmem:[#allocation8 + $0x1c] sm:$0xf]
    %v261 = vld [vmem:[#allocation8 + $0x20] sm:$0xf]
    %v262 = vld [vmem:[#allocation8 + $0x24] sm:$0xf]
    %v263 = vld [vmem:[#allocation8 + $0x28] sm:$0xf]
    %v264 = vld [vmem:[#allocation8 + $0x2c] sm:$0xf]
    %v265 = vld [vmem:[#allocation8 + $0x30] sm:$0xf]
    %v266 = vld [vmem:[#allocation8 + $0x34] sm:$0xf]
    %v267 = vld [vmem:[#allocation8 + $0x38] sm:$0xf]
    %v268 = vld [vmem:[#allocation8 + $0x3c] sm:$0xf]
    %v269 = vld [vmem:[#allocation8 + $0x40] sm:$0xf]
    %v270 = vld [vmem:[#allocation8 + $0x44] sm:$0xf]
    %v271 = vld [vmem:[#allocation8 + $0x48] sm:$0xf]
    %v272 = vld [vmem:[#allocation8 + $0x4c] sm:$0xf]
    %v273 = vld [vmem:[#allocation8 + $0x50] sm:$0xf]
    %v274 = vld [vmem:[#allocation8 + $0x54] sm:$0xf]
    %v275 = vld [vmem:[#allocation8 + $0x58] sm:$0xf]
    %v276 = vld [vmem:[#allocation8 + $0x5c] sm:$0xf]
    %v277 = vld [vmem:[#allocation8 + $0x60] sm:$0xf]
    %v278 = vld [vmem:[#allocation8 + $0x64] sm:$0xf]
    %v279 = vld [vmem:[#allocation8 + $0x68] sm:$0xf]
    %v280 = vld [vmem:[#allocation8 + $0x6c] sm:$0xf]
    %v281 = vld [vmem:[#allocation8 + $0x70] sm:$0xf]
    %v282 = vld [vmem:[#allocation8 + $0x74] sm:$0xf]
    %v283 = vld [vmem:[#allocation8 + $0x78] sm:$0xf]
    %v284 = vld [vmem:[#allocation8 + $0x7c] sm:$0xf]
    %v285 = vld [vmem:[#allocation8 + $0x80] sm:$0xf]
    %v286 = vld [vmem:[#allocation8 + $0x84] sm:$0xf]
    %v287 = vld [vmem:[#allocation8 + $0x88] sm:$0xf]
    %v288 = vld [vmem:[#allocation8 + $0x8c] sm:$0xf]
    %v289 = vld [vmem:[#allocation8 + $0x90] sm:$0xf]
    %v290 = vld [vmem:[#allocation8 + $0x94] sm:$0xf]
    %v291 = vld [vmem:[#allocation8 + $0x98] sm:$0xf]
    %v292 = vld [vmem:[#allocation8 + $0x9c] sm:$0xf]
    %v293 = vld [vmem:[#allocation8 + $0xa0] sm:$0xf]
    %v294 = vld [vmem:[#allocation8 + $0xa4] sm:$0xf]
    %v295 = vld [vmem:[#allocation8 + $0xa8] sm:$0xf]
    %v296 = vld [vmem:[#allocation8 + $0xac] sm:$0xf]
    %v297 = vld [vmem:[#allocation8 + $0xb0] sm:$0xf]
    %v298 = vld [vmem:[#allocation8 + $0xb4] sm:$0xf]
    %v299 = vld [vmem:[#allocation8 + $0xb8] sm:$0xf]
    %v300 = vld [vmem:[#allocation8 + $0xbc] sm:$0xf]
    %v301 = vld [vmem:[#allocation8 + $0xc0] sm:$0xf]
    %v302 = vld [vmem:[#allocation8 + $0xc4] sm:$0xf]
    %v303 = vld [vmem:[#allocation8 + $0xc8] sm:$0xf]
    %v304 = vld [vmem:[#allocation8 + $0xcc] sm:$0xf]
    %v305 = vld [vmem:[#allocation8 + $0xd0] sm:$0xf]
    %v306 = vld [vmem:[#allocation8 + $0xd4] sm:$0xf]
    %v307 = vld [vmem:[#allocation8 + $0xd8] sm:$0xf]
    %v308 = vld [vmem:[#allocation8 + $0xdc] sm:$0xf]
    %v309 = vld [vmem:[#allocation8 + $0xe0] sm:$0xf]
    %v310 = vld [vmem:[#allocation8 + $0xe4] sm:$0xf]
    %v311 = vld [vmem:[#allocation8 + $0xe8] sm:$0xf]
    %v312 = vld [vmem:[#allocation8 + $0xec] sm:$0xf]
    %v313 = vld [vmem:[#allocation8 + $0xf0] sm:$0xf]
    %v314 = vld [vmem:[#allocation8 + $0xf4] sm:$0xf]
    %v315 = vld [vmem:[#allocation8 + $0xf8] sm:$0xf]
    %v316 = vld [vmem:[#allocation8 + $0xfc] sm:$0xf]
    %v317 = vld [vmem:[#allocation8 + $0x100] sm:$0xf]
    %v318 = vld [vmem:[#allocation8 + $0x104] sm:$0xf]
    %v319 = vld [vmem:[#allocation8 + $0x108] sm:$0xf]
    %v320 = vld [vmem:[#allocation8 + $0x10c] sm:$0xf]
    %v321 = vld [vmem:[#allocation8 + $0x110] sm:$0xf]
    %v322 = vld [vmem:[#allocation8 + $0x114] sm:$0xf]
    %v323 = vld [vmem:[#allocation8 + $0x118] sm:$0xf]
    %v324 = vld [vmem:[#allocation8 + $0x11c] sm:$0xf]
    %v325 = vld [vmem:[#allocation8 + $0x120] sm:$0xf]
    %v326 = vld [vmem:[#allocation8 + $0x124] sm:$0xf]
    %v327 = vld [vmem:[#allocation8 + $0x128] sm:$0xf]
    %v328 = vld [vmem:[#allocation8 + $0x12c] sm:$0xf]
    %v329 = vld [vmem:[#allocation8 + $0x130] sm:$0xf]
    %v330 = vld [vmem:[#allocation8 + $0x134] sm:$0xf]
    %v331 = vld [vmem:[#allocation8 + $0x138] sm:$0xf]
    %v332 = vld [vmem:[#allocation8 + $0x13c] sm:$0xf]
    %v333 = vld [vmem:[#allocation8 + $0x140] sm:$0xf]
    %v334 = vld [vmem:[#allocation8 + $0x144] sm:$0xf]
    %v335 = vld [vmem:[#allocation8 + $0x148] sm:$0xf]
    %v336 = vld [vmem:[#allocation8 + $0x14c] sm:$0xf]
    %v337 = vld [vmem:[#allocation8 + $0x150] sm:$0xf]
    %v338 = vld [vmem:[#allocation8 + $0x154] sm:$0xf]
    %v339 = vld [vmem:[#allocation8 + $0x158] sm:$0xf]
    %v340 = vld [vmem:[#allocation8 + $0x15c] sm:$0xf]
    %v341 = vld [vmem:[#allocation8 + $0x160] sm:$0xf]
    %v342 = vld [vmem:[#allocation8 + $0x164] sm:$0xf]
    %v343 = vld [vmem:[#allocation8 + $0x168] sm:$0xf]
    %v344 = vld [vmem:[#allocation8 + $0x16c] sm:$0xf]
    %v345 = vld [vmem:[#allocation8 + $0x170] sm:$0xf]
    %v346 = vld [vmem:[#allocation8 + $0x174] sm:$0xf]
    %v347 = vld [vmem:[#allocation8 + $0x178] sm:$0xf]
    %v348 = vld [vmem:[#allocation8 + $0x17c] sm:$0xf]
    %v349 = vld [vmem:[#allocation8 + $0x180] sm:$0xf]
    %v350 = vld [vmem:[#allocation8 + $0x184] sm:$0xf]
    %v351 = vld [vmem:[#allocation8 + $0x188] sm:$0xf]
    %v352 = vld [vmem:[#allocation8 + $0x18c] sm:$0xf]
    %v353 = vld [vmem:[#allocation8 + $0x190] sm:$0xf]
    %v354 = vld [vmem:[#allocation8 + $0x194] sm:$0xf]
    %v355 = vld [vmem:[#allocation8 + $0x198] sm:$0xf]
    %v356 = vld [vmem:[#allocation8 + $0x19c] sm:$0xf]
    %v357 = vld [vmem:[#allocation8 + $0x1a0] sm:$0xf]
    %v358 = vld [vmem:[#allocation8 + $0x1a4] sm:$0xf]
    %v359 = vld [vmem:[#allocation8 + $0x1a8] sm:$0xf]
    %v360 = vld [vmem:[#allocation8 + $0x1ac] sm:$0xf]
    %v361 = vld [vmem:[#allocation8 + $0x1b0] sm:$0xf]
    %v362 = vld [vmem:[#allocation8 + $0x1b4] sm:$0xf]
    %v363 = vld [vmem:[#allocation8 + $0x1b8] sm:$0xf]
    %v364 = vld [vmem:[#allocation8 + $0x1bc] sm:$0xf]
    %v365 = vld [vmem:[#allocation8 + $0x1c0] sm:$0xf]
    %v366 = vld [vmem:[#allocation8 + $0x1c4] sm:$0xf]
    %v367 = vld [vmem:[#allocation8 + $0x1c8] sm:$0xf]
    %v368 = vld [vmem:[#allocation8 + $0x1cc] sm:$0xf]
    %v369 = vld [vmem:[#allocation8 + $0x1d0] sm:$0xf]
    %v370 = vld [vmem:[#allocation8 + $0x1d4] sm:$0xf]
    %v371 = vld [vmem:[#allocation8 + $0x1d8] sm:$0xf]
    %v372 = vld [vmem:[#allocation8 + $0x1dc] sm:$0xf]
    %v373 = vld [vmem:[#allocation8 + $0x1e0] sm:$0xf]
    %v374 = vld [vmem:[#allocation8 + $0x1e4] sm:$0xf]
    %v375 = vld [vmem:[#allocation8 + $0x1e8] sm:$0xf]
    %v376 = vld [vmem:[#allocation8 + $0x1ec] sm:$0xf]
    %v377 = vld [vmem:[#allocation8 + $0x1f0] sm:$0xf]
    %v378 = vld [vmem:[#allocation8 + $0x1f4] sm:$0xf]
    %v379 = vld [vmem:[#allocation8 + $0x1f8] sm:$0xf]
    %v380 = vld [vmem:[#allocation8 + $0x1fc] sm:$0xf]
    %v509 = vunpack.c.l.b16 %v253
    %v510 = vunpack.c.l.b16 %v254
    %v511 = vunpack.c.l.b16 %v255
    %v512 = vunpack.c.l.b16 %v256
    %v513 = vunpack.c.l.b16 %v257
    %v514 = vunpack.c.l.b16 %v258
    %v515 = vunpack.c.l.b16 %v259
    %v516 = vunpack.c.l.b16 %v260
    %v517 = vunpack.c.l.b16 %v261
    %v518 = vunpack.c.l.b16 %v262
    %v519 = vunpack.c.l.b16 %v263
    %v520 = vunpack.c.l.b16 %v264
    %v521 = vunpack.c.l.b16 %v265
    %v522 = vunpack.c.l.b16 %v266
    %v523 = vunpack.c.l.b16 %v267
    %v524 = vunpack.c.l.b16 %v268
    %v525 = vunpack.c.l.b16 %v269
    %v526 = vunpack.c.l.b16 %v270
    %v527 = vunpack.c.l.b16 %v271
    %v528 = vunpack.c.l.b16 %v272
    %v529 = vunpack.c.l.b16 %v273
    %v530 = vunpack.c.l.b16 %v274
    %v531 = vunpack.c.l.b16 %v275
    %v532 = vunpack.c.l.b16 %v276
    %v533 = vunpack.c.l.b16 %v277
    %v534 = vunpack.c.l.b16 %v278
    %v535 = vunpack.c.l.b16 %v279
    %v536 = vunpack.c.l.b16 %v280
    %v537 = vunpack.c.l.b16 %v281
    %v538 = vunpack.c.l.b16 %v282
    %v539 = vunpack.c.l.b16 %v283
    %v540 = vunpack.c.l.b16 %v284
    %v541 = vunpack.c.l.b16 %v285
    %v542 = vunpack.c.l.b16 %v286
    %v543 = vunpack.c.l.b16 %v287
    %v544 = vunpack.c.l.b16 %v288
    %v545 = vunpack.c.l.b16 %v289
    %v546 = vunpack.c.l.b16 %v290
    %v547 = vunpack.c.l.b16 %v291
    %v548 = vunpack.c.l.b16 %v292
    %v549 = vunpack.c.l.b16 %v293
    %v550 = vunpack.c.l.b16 %v294
    %v551 = vunpack.c.l.b16 %v295
    %v552 = vunpack.c.l.b16 %v296
    %v553 = vunpack.c.l.b16 %v297
    %v554 = vunpack.c.l.b16 %v298
    %v555 = vunpack.c.l.b16 %v299
    %v556 = vunpack.c.l.b16 %v300
    %v557 = vunpack.c.l.b16 %v301
    %v558 = vunpack.c.l.b16 %v302
    %v559 = vunpack.c.l.b16 %v303
    %v560 = vunpack.c.l.b16 %v304
    %v561 = vunpack.c.l.b16 %v305
    %v562 = vunpack.c.l.b16 %v306
    %v563 = vunpack.c.l.b16 %v307
    %v564 = vunpack.c.l.b16 %v308
    %v565 = vunpack.c.l.b16 %v309
    %v566 = vunpack.c.l.b16 %v310
    %v567 = vunpack.c.l.b16 %v311
    %v568 = vunpack.c.l.b16 %v312
    %v569 = vunpack.c.l.b16 %v313
    %v570 = vunpack.c.l.b16 %v314
    %v571 = vunpack.c.l.b16 %v315
    %v572 = vunpack.c.l.b16 %v316
    %v573 = vunpack.c.l.b16 %v317
    %v574 = vunpack.c.l.b16 %v318
    %v575 = vunpack.c.l.b16 %v319
    %v576 = vunpack.c.l.b16 %v320
    %v577 = vunpack.c.l.b16 %v321
    %v578 = vunpack.c.l.b16 %v322
    %v579 = vunpack.c.l.b16 %v323
    %v580 = vunpack.c.l.b16 %v324
    %v581 = vunpack.c.l.b16 %v325
    %v582 = vunpack.c.l.b16 %v326
    %v583 = vunpack.c.l.b16 %v327
    %v584 = vunpack.c.l.b16 %v328
    %v585 = vunpack.c.l.b16 %v329
    %v586 = vunpack.c.l.b16 %v330
    %v587 = vunpack.c.l.b16 %v331
    %v588 = vunpack.c.l.b16 %v332
    %v589 = vunpack.c.l.b16 %v333
    %v590 = vunpack.c.l.b16 %v334
    %v591 = vunpack.c.l.b16 %v335
    %v592 = vunpack.c.l.b16 %v336
    %v593 = vunpack.c.l.b16 %v337
    %v594 = vunpack.c.l.b16 %v338
    %v595 = vunpack.c.l.b16 %v339
    %v596 = vunpack.c.l.b16 %v340
    %v597 = vunpack.c.l.b16 %v341
    %v598 = vunpack.c.l.b16 %v342
    %v599 = vunpack.c.l.b16 %v343
    %v600 = vunpack.c.l.b16 %v344
    %v601 = vunpack.c.l.b16 %v345
    %v602 = vunpack.c.l.b16 %v346
    %v603 = vunpack.c.l.b16 %v347
    %v604 = vunpack.c.l.b16 %v348
    %v605 = vunpack.c.l.b16 %v349
    %v606 = vunpack.c.l.b16 %v350
    %v607 = vunpack.c.l.b16 %v351
    %v608 = vunpack.c.l.b16 %v352
    %v609 = vunpack.c.l.b16 %v353
    %v610 = vunpack.c.l.b16 %v354
    %v611 = vunpack.c.l.b16 %v355
    %v612 = vunpack.c.l.b16 %v356
    %v613 = vunpack.c.l.b16 %v357
    %v614 = vunpack.c.l.b16 %v358
    %v615 = vunpack.c.l.b16 %v359
    %v616 = vunpack.c.l.b16 %v360
    %v617 = vunpack.c.l.b16 %v361
    %v618 = vunpack.c.l.b16 %v362
    %v619 = vunpack.c.l.b16 %v363
    %v620 = vunpack.c.l.b16 %v364
    %v621 = vunpack.c.l.b16 %v365
    %v622 = vunpack.c.l.b16 %v366
    %v623 = vunpack.c.l.b16 %v367
    %v624 = vunpack.c.l.b16 %v368
    %v625 = vunpack.c.l.b16 %v369
    %v626 = vunpack.c.l.b16 %v370
    %v627 = vunpack.c.l.b16 %v371
    %v628 = vunpack.c.l.b16 %v372
    %v629 = vunpack.c.l.b16 %v373
    %v630 = vunpack.c.l.b16 %v374
    %v631 = vunpack.c.l.b16 %v375
    %v632 = vunpack.c.l.b16 %v376
    %v633 = vunpack.c.l.b16 %v377
    %v634 = vunpack.c.l.b16 %v378
    %v635 = vunpack.c.l.b16 %v379
    %v636 = vunpack.c.l.b16 %v380
    %v637 = vpack.c.b16 %v510, %v509
    %v638 = vpack.c.b16 %v512, %v511
    %v639 = vpack.c.b16 %v514, %v513
    %v640 = vpack.c.b16 %v516, %v515
    %v641 = vpack.c.b16 %v518, %v517
    %v642 = vpack.c.b16 %v520, %v519
    %v643 = vpack.c.b16 %v522, %v521
    %v644 = vpack.c.b16 %v524, %v523
    %v645 = vpack.c.b16 %v526, %v525
    %v646 = vpack.c.b16 %v528, %v527
    %v647 = vpack.c.b16 %v530, %v529
    %v648 = vpack.c.b16 %v532, %v531
    %v649 = vpack.c.b16 %v534, %v533
    %v650 = vpack.c.b16 %v536, %v535
    %v651 = vpack.c.b16 %v538, %v537
    %v652 = vpack.c.b16 %v540, %v539
    %v653 = vpack.c.b16 %v542, %v541
    %v654 = vpack.c.b16 %v544, %v543
    %v655 = vpack.c.b16 %v546, %v545
    %v656 = vpack.c.b16 %v548, %v547
    %v657 = vpack.c.b16 %v550, %v549
    %v658 = vpack.c.b16 %v552, %v551
    %v659 = vpack.c.b16 %v554, %v553
    %v660 = vpack.c.b16 %v556, %v555
    %v661 = vpack.c.b16 %v558, %v557
    %v662 = vpack.c.b16 %v560, %v559
    %v663 = vpack.c.b16 %v562, %v561
    %v664 = vpack.c.b16 %v564, %v563
    %v665 = vpack.c.b16 %v566, %v565
    %v666 = vpack.c.b16 %v568, %v567
    %v667 = vpack.c.b16 %v570, %v569
    %v668 = vpack.c.b16 %v572, %v571
    %v669 = vpack.c.b16 %v574, %v573
    %v670 = vpack.c.b16 %v576, %v575
    %v671 = vpack.c.b16 %v578, %v577
    %v672 = vpack.c.b16 %v580, %v579
    %v673 = vpack.c.b16 %v582, %v581
    %v674 = vpack.c.b16 %v584, %v583
    %v675 = vpack.c.b16 %v586, %v585
    %v676 = vpack.c.b16 %v588, %v587
    %v677 = vpack.c.b16 %v590, %v589
    %v678 = vpack.c.b16 %v592, %v591
    %v679 = vpack.c.b16 %v594, %v593
    %v680 = vpack.c.b16 %v596, %v595
    %v681 = vpack.c.b16 %v598, %v597
    %v682 = vpack.c.b16 %v600, %v599
    %v683 = vpack.c.b16 %v602, %v601
    %v684 = vpack.c.b16 %v604, %v603
    %v685 = vpack.c.b16 %v606, %v605
    %v686 = vpack.c.b16 %v608, %v607
    %v687 = vpack.c.b16 %v610, %v609
    %v688 = vpack.c.b16 %v612, %v611
    %v689 = vpack.c.b16 %v614, %v613
    %v690 = vpack.c.b16 %v616, %v615
    %v691 = vpack.c.b16 %v618, %v617
    %v692 = vpack.c.b16 %v620, %v619
    %v693 = vpack.c.b16 %v622, %v621
    %v694 = vpack.c.b16 %v624, %v623
    %v695 = vpack.c.b16 %v626, %v625
    %v696 = vpack.c.b16 %v628, %v627
    %v697 = vpack.c.b16 %v630, %v629
    %v698 = vpack.c.b16 %v632, %v631
    %v699 = vpack.c.b16 %v634, %v633
    %v700 = vpack.c.b16 %v636, %v635
    %765 = vmatprep.subr.bf16.mxu0 0
    %766 = vmatpush1.bf16.msra.mxu0 %v637
    %767 = vmatprep.subr.bf16.mxu0 0
    %768 = vmatpush1.bf16.msra.mxu0 %v638
    %769 = vmatprep.subr.bf16.mxu0 0
    %770 = vmatpush1.bf16.msra.mxu0 %v639
    %771 = vmatprep.subr.bf16.mxu0 0
    %772 = vmatpush1.bf16.msra.mxu0 %v640
    %773 = vmatprep.subr.bf16.mxu0 0
    %774 = vmatpush1.bf16.msra.mxu0 %v641
    %775 = vmatprep.subr.bf16.mxu0 0
    %776 = vmatpush1.bf16.msra.mxu0 %v642
    %777 = vmatprep.subr.bf16.mxu0 0
    %778 = vmatpush1.bf16.msra.mxu0 %v643
    %779 = vmatprep.subr.bf16.mxu0 0
    %780 = vmatpush1.bf16.msra.mxu0 %v644
    %781 = vmatprep.subr.bf16.mxu0 0
    %782 = vmatpush1.bf16.msra.mxu0 %v645
    %783 = vmatprep.subr.bf16.mxu0 0
    %784 = vmatpush1.bf16.msra.mxu0 %v646
    %785 = vmatprep.subr.bf16.mxu0 0
    %786 = vmatpush1.bf16.msra.mxu0 %v647
    %787 = vmatprep.subr.bf16.mxu0 0
    %788 = vmatpush1.bf16.msra.mxu0 %v648
    %789 = vmatprep.subr.bf16.mxu0 0
    %790 = vmatpush1.bf16.msra.mxu0 %v649
    %791 = vmatprep.subr.bf16.mxu0 0
    %792 = vmatpush1.bf16.msra.mxu0 %v650
    %793 = vmatprep.subr.bf16.mxu0 0
    %794 = vmatpush1.bf16.msra.mxu0 %v651
    %795 = vmatprep.subr.bf16.mxu0 0
    %796 = vmatpush1.bf16.msra.mxu0 %v652
    %797 = vmatprep.mubr.bf16.mxu0 %v118
    %798 = vmatmul.mubr.bf16.gmra.mrb[0].mxu0 %v117
    %v799 = vpop.f32.mrb[0].mxu0
    %v800 = vadd.f32 0.0, %v799
    %v801 = vpop.f32.mrb[0].mxu0
    %v802 = vpop.f32.mrb[0].mxu0
    %v803 = vadd.f32 0.0, %v802
    %v804 = vpop.f32.mrb[0].mxu0
    %805 = vdwg.mxu0
    %806 = vmatprep.subr.bf16.mxu0 0
    %807 = vmatpush1.bf16.msra.mxu0 %v653
    %808 = vmatprep.subr.bf16.mxu0 0
    %809 = vmatpush1.bf16.msra.mxu0 %v654
    %810 = vmatprep.subr.bf16.mxu0 0
    %811 = vmatpush1.bf16.msra.mxu0 %v655
    %812 = vmatprep.subr.bf16.mxu0 0
    %813 = vmatpush1.bf16.msra.mxu0 %v656
    %814 = vmatprep.subr.bf16.mxu0 0
    %815 = vmatpush1.bf16.msra.mxu0 %v657
    %816 = vmatprep.subr.bf16.mxu0 0
    %817 = vmatpush1.bf16.msra.mxu0 %v658
    %818 = vmatprep.subr.bf16.mxu0 0
    %819 = vmatpush1.bf16.msra.mxu0 %v659
    %820 = vmatprep.subr.bf16.mxu0 0
    %821 = vmatpush1.bf16.msra.mxu0 %v660
    %822 = vmatprep.subr.bf16.mxu0 0
    %823 = vmatpush1.bf16.msra.mxu0 %v661
    %824 = vmatprep.subr.bf16.mxu0 0
    %825 = vmatpush1.bf16.msra.mxu0 %v662
    %826 = vmatprep.subr.bf16.mxu0 0
    %827 = vmatpush1.bf16.msra.mxu0 %v663
    %828 = vmatprep.subr.bf16.mxu0 0
    %829 = vmatpush1.bf16.msra.mxu0 %v664
    %830 = vmatprep.subr.bf16.mxu0 0
    %831 = vmatpush1.bf16.msra.mxu0 %v665
    %832 = vmatprep.subr.bf16.mxu0 0
    %833 = vmatpush1.bf16.msra.mxu0 %v666
    %834 = vmatprep.subr.bf16.mxu0 0
    %835 = vmatpush1.bf16.msra.mxu0 %v667
    %836 = vmatprep.subr.bf16.mxu0 0
    %837 = vmatpush1.bf16.msra.mxu0 %v668
    %838 = vmatprep.mubr.bf16.mxu0 %v120
    %839 = vmatmul.mubr.bf16.gmra.mrb[0].mxu0 %v119
    %v840 = vpop.f32.mrb[0].mxu0
    %v841 = vadd.f32 %v800, %v840
    %v842 = vpop.f32.mrb[0].mxu0
    %v843 = vpop.f32.mrb[0].mxu0
    %v844 = vadd.f32 %v803, %v843
    %v845 = vpop.f32.mrb[0].mxu0
    %846 = vdwg.mxu0
    %847 = vmatprep.subr.bf16.mxu0 0
    %848 = vmatpush1.bf16.msra.mxu0 %v669
    %849 = vmatprep.subr.bf16.mxu0 0
    %850 = vmatpush1.bf16.msra.mxu0 %v670
    %851 = vmatprep.subr.bf16.mxu0 0
    %852 = vmatpush1.bf16.msra.mxu0 %v671
    %853 = vmatprep.subr.bf16.mxu0 0
    %854 = vmatpush1.bf16.msra.mxu0 %v672
    %855 = vmatprep.subr.bf16.mxu0 0
    %856 = vmatpush1.bf16.msra.mxu0 %v673
    %857 = vmatprep.subr.bf16.mxu0 0
    %858 = vmatpush1.bf16.msra.mxu0 %v674
    %859 = vmatprep.subr.bf16.mxu0 0
    %860 = vmatpush1.bf16.msra.mxu0 %v675
    %861 = vmatprep.subr.bf16.mxu0 0
    %862 = vmatpush1.bf16.msra.mxu0 %v676
    %863 = vmatprep.subr.bf16.mxu0 0
    %864 = vmatpush1.bf16.msra.mxu0 %v677
    %865 = vmatprep.subr.bf16.mxu0 0
    %866 = vmatpush1.bf16.msra.mxu0 %v678
    %867 = vmatprep.subr.bf16.mxu0 0
    %868 = vmatpush1.bf16.msra.mxu0 %v679
    %869 = vmatprep.subr.bf16.mxu0 0
    %870 = vmatpush1.bf16.msra.mxu0 %v680
    %871 = vmatprep.subr.bf16.mxu0 0
    %872 = vmatpush1.bf16.msra.mxu0 %v681
    %873 = vmatprep.subr.bf16.mxu0 0
    %874 = vmatpush1.bf16.msra.mxu0 %v682
    %875 = vmatprep.subr.bf16.mxu0 0
    %876 = vmatpush1.bf16.msra.mxu0 %v683
    %877 = vmatprep.subr.bf16.mxu0 0
    %878 = vmatpush1.bf16.msra.mxu0 %v684
    %879 = vmatprep.mubr.bf16.mxu0 %v122
    %880 = vmatmul.mubr.bf16.gmra.mrb[0].mxu0 %v121
    %v881 = vpop.f32.mrb[0].mxu0
    %v882 = vadd.f32 %v841, %v881
    %v883 = vpop.f32.mrb[0].mxu0
    %v884 = vpop.f32.mrb[0].mxu0
    %v885 = vadd.f32 %v844, %v884
    %v886 = vpop.f32.mrb[0].mxu0
    %887 = vdwg.mxu0
    %888 = vmatprep.subr.bf16.mxu0 0
    %889 = vmatpush1.bf16.msra.mxu0 %v685
    %890 = vmatprep.subr.bf16.mxu0 0
    %891 = vmatpush1.bf16.msra.mxu0 %v686
    %892 = vmatprep.subr.bf16.mxu0 0
    %893 = vmatpush1.bf16.msra.mxu0 %v687
    %894 = vmatprep.subr.bf16.mxu0 0
    %895 = vmatpush1.bf16.msra.mxu0 %v688
    %896 = vmatprep.subr.bf16.mxu0 0
    %897 = vmatpush1.bf16.msra.mxu0 %v689
    %898 = vmatprep.subr.bf16.mxu0 0
    %899 = vmatpush1.bf16.msra.mxu0 %v690
    %900 = vmatprep.subr.bf16.mxu0 0
    %901 = vmatpush1.bf16.msra.mxu0 %v691
    %902 = vmatprep.subr.bf16.mxu0 0
    %903 = vmatpush1.bf16.msra.mxu0 %v692
    %904 = vmatprep.subr.bf16.mxu0 0
    %905 = vmatpush1.bf16.msra.mxu0 %v693
    %906 = vmatprep.subr.bf16.mxu0 0
    %907 = vmatpush1.bf16.msra.mxu0 %v694
    %908 = vmatprep.subr.bf16.mxu0 0
    %909 = vmatpush1.bf16.msra.mxu0 %v695
    %910 = vmatprep.subr.bf16.mxu0 0
    %911 = vmatpush1.bf16.msra.mxu0 %v696
    %912 = vmatprep.subr.bf16.mxu0 0
    %913 = vmatpush1.bf16.msra.mxu0 %v697
    %914 = vmatprep.subr.bf16.mxu0 0
    %915 = vmatpush1.bf16.msra.mxu0 %v698
    %916 = vmatprep.subr.bf16.mxu0 0
    %917 = vmatpush1.bf16.msra.mxu0 %v699
    %918 = vmatprep.subr.bf16.mxu0 0
    %919 = vmatpush1.bf16.msra.mxu0 %v700
    %920 = vmatprep.mubr.bf16.mxu0 %v124
    %921 = vmatmul.mubr.bf16.gmra.mrb[0].mxu0 %v123
    %v922 = vpop.f32.mrb[0].mxu0
    %v923 = vadd.f32 %v882, %v922
    %v924 = vpop.f32.mrb[0].mxu0
    %v925 = vpop.f32.mrb[0].mxu0
    %v926 = vadd.f32 %v885, %v925
    %v927 = vpop.f32.mrb[0].mxu0
    %928 = vdwg.mxu0
    %v1057 = vunpack.c.l.b16 %v125
    %v1058 = vunpack.c.l.b16 %v126
    %v1059 = vunpack.c.l.b16 %v127
    %v1060 = vunpack.c.l.b16 %v128
    %v1061 = vunpack.c.l.b16 %v129
    %v1062 = vunpack.c.l.b16 %v130
    %v1063 = vunpack.c.l.b16 %v131
    %v1064 = vunpack.c.l.b16 %v132
    %v1065 = vunpack.c.l.b16 %v133
    %v1066 = vunpack.c.l.b16 %v134
    %v1067 = vunpack.c.l.b16 %v135
    %v1068 = vunpack.c.l.b16 %v136
    %v1069 = vunpack.c.l.b16 %v137
    %v1070 = vunpack.c.l.b16 %v138
    %v1071 = vunpack.c.l.b16 %v139
    %v1072 = vunpack.c.l.b16 %v140
    %v1073 = vunpack.c.l.b16 %v141
    %v1074 = vunpack.c.l.b16 %v142
    %v1075 = vunpack.c.l.b16 %v143
    %v1076 = vunpack.c.l.b16 %v144
    %v1077 = vunpack.c.l.b16 %v145
    %v1078 = vunpack.c.l.b16 %v146
    %v1079 = vunpack.c.l.b16 %v147
    %v1080 = vunpack.c.l.b16 %v148
    %v1081 = vunpack.c.l.b16 %v149
    %v1082 = vunpack.c.l.b16 %v150
    %v1083 = vunpack.c.l.b16 %v151
    %v1084 = vunpack.c.l.b16 %v152
    %v1085 = vunpack.c.l.b16 %v153
    %v1086 = vunpack.c.l.b16 %v154
    %v1087 = vunpack.c.l.b16 %v155
    %v1088 = vunpack.c.l.b16 %v156
    %v1089 = vunpack.c.l.b16 %v157
    %v1090 = vunpack.c.l.b16 %v158
    %v1091 = vunpack.c.l.b16 %v159
    %v1092 = vunpack.c.l.b16 %v160
    %v1093 = vunpack.c.l.b16 %v161
    %v1094 = vunpack.c.l.b16 %v162
    %v1095 = vunpack.c.l.b16 %v163
    %v1096 = vunpack.c.l.b16 %v164
    %v1097 = vunpack.c.l.b16 %v165
    %v1098 = vunpack.c.l.b16 %v166
    %v1099 = vunpack.c.l.b16 %v167
    %v1100 = vunpack.c.l.b16 %v168
    %v1101 = vunpack.c.l.b16 %v169
    %v1102 = vunpack.c.l.b16 %v170
    %v1103 = vunpack.c.l.b16 %v171
    %v1104 = vunpack.c.l.b16 %v172
    %v1105 = vunpack.c.l.b16 %v173
    %v1106 = vunpack.c.l.b16 %v174
    %v1107 = vunpack.c.l.b16 %v175
    %v1108 = vunpack.c.l.b16 %v176
    %v1109 = vunpack.c.l.b16 %v177
    %v1110 = vunpack.c.l.b16 %v178
    %v1111 = vunpack.c.l.b16 %v179
    %v1112 = vunpack.c.l.b16 %v180
    %v1113 = vunpack.c.l.b16 %v181
    %v1114 = vunpack.c.l.b16 %v182
    %v1115 = vunpack.c.l.b16 %v183
    %v1116 = vunpack.c.l.b16 %v184
    %v1117 = vunpack.c.l.b16 %v185
    %v1118 = vunpack.c.l.b16 %v186
    %v1119 = vunpack.c.l.b16 %v187
    %v1120 = vunpack.c.l.b16 %v188
    %v1121 = vunpack.c.l.b16 %v189
    %v1122 = vunpack.c.l.b16 %v190
    %v1123 = vunpack.c.l.b16 %v191
    %v1124 = vunpack.c.l.b16 %v192
    %v1125 = vunpack.c.l.b16 %v193
    %v1126 = vunpack.c.l.b16 %v194
    %v1127 = vunpack.c.l.b16 %v195
    %v1128 = vunpack.c.l.b16 %v196
    %v1129 = vunpack.c.l.b16 %v197
    %v1130 = vunpack.c.l.b16 %v198
    %v1131 = vunpack.c.l.b16 %v199
    %v1132 = vunpack.c.l.b16 %v200
    %v1133 = vunpack.c.l.b16 %v201
    %v1134 = vunpack.c.l.b16 %v202
    %v1135 = vunpack.c.l.b16 %v203
    %v1136 = vunpack.c.l.b16 %v204
    %v1137 = vunpack.c.l.b16 %v205
    %v1138 = vunpack.c.l.b16 %v206
    %v1139 = vunpack.c.l.b16 %v207
    %v1140 = vunpack.c.l.b16 %v208
    %v1141 = vunpack.c.l.b16 %v209
    %v1142 = vunpack.c.l.b16 %v210
    %v1143 = vunpack.c.l.b16 %v211
    %v1144 = vunpack.c.l.b16 %v212
    %v1145 = vunpack.c.l.b16 %v213
    %v1146 = vunpack.c.l.b16 %v214
    %v1147 = vunpack.c.l.b16 %v215
    %v1148 = vunpack.c.l.b16 %v216
    %v1149 = vunpack.c.l.b16 %v217
    %v1150 = vunpack.c.l.b16 %v218
    %v1151 = vunpack.c.l.b16 %v219
    %v1152 = vunpack.c.l.b16 %v220
    %v1153 = vunpack.c.l.b16 %v221
    %v1154 = vunpack.c.l.b16 %v222
    %v1155 = vunpack.c.l.b16 %v223
    %v1156 = vunpack.c.l.b16 %v224
    %v1157 = vunpack.c.l.b16 %v225
    %v1158 = vunpack.c.l.b16 %v226
    %v1159 = vunpack.c.l.b16 %v227
    %v1160 = vunpack.c.l.b16 %v228
    %v1161 = vunpack.c.l.b16 %v229
    %v1162 = vunpack.c.l.b16 %v230
    %v1163 = vunpack.c.l.b16 %v231
    %v1164 = vunpack.c.l.b16 %v232
    %v1165 = vunpack.c.l.b16 %v233
    %v1166 = vunpack.c.l.b16 %v234
    %v1167 = vunpack.c.l.b16 %v235
    %v1168 = vunpack.c.l.b16 %v236
    %v1169 = vunpack.c.l.b16 %v237
    %v1170 = vunpack.c.l.b16 %v238
    %v1171 = vunpack.c.l.b16 %v239
    %v1172 = vunpack.c.l.b16 %v240
    %v1173 = vunpack.c.l.b16 %v241
    %v1174 = vunpack.c.l.b16 %v242
    %v1175 = vunpack.c.l.b16 %v243
    %v1176 = vunpack.c.l.b16 %v244
    %v1177 = vunpack.c.l.b16 %v245
    %v1178 = vunpack.c.l.b16 %v246
    %v1179 = vunpack.c.l.b16 %v247
    %v1180 = vunpack.c.l.b16 %v248
    %v1181 = vunpack.c.l.b16 %v249
    %v1182 = vunpack.c.l.b16 %v250
    %v1183 = vunpack.c.l.b16 %v251
    %v1184 = vunpack.c.l.b16 %v252
    %v1185 = vpack.c.b16 %v1058, %v1057
    %v1186 = vpack.c.b16 %v1060, %v1059
    %v1187 = vpack.c.b16 %v1062, %v1061
    %v1188 = vpack.c.b16 %v1064, %v1063
    %v1189 = vpack.c.b16 %v1066, %v1065
    %v1190 = vpack.c.b16 %v1068, %v1067
    %v1191 = vpack.c.b16 %v1070, %v1069
    %v1192 = vpack.c.b16 %v1072, %v1071
    %v1193 = vpack.c.b16 %v1074, %v1073
    %v1194 = vpack.c.b16 %v1076, %v1075
    %v1195 = vpack.c.b16 %v1078, %v1077
    %v1196 = vpack.c.b16 %v1080, %v1079
    %v1197 = vpack.c.b16 %v1082, %v1081
    %v1198 = vpack.c.b16 %v1084, %v1083
    %v1199 = vpack.c.b16 %v1086, %v1085
    %v1200 = vpack.c.b16 %v1088, %v1087
    %v1201 = vpack.c.b16 %v1090, %v1089
    %v1202 = vpack.c.b16 %v1092, %v1091
    %v1203 = vpack.c.b16 %v1094, %v1093
    %v1204 = vpack.c.b16 %v1096, %v1095
    %v1205 = vpack.c.b16 %v1098, %v1097
    %v1206 = vpack.c.b16 %v1100, %v1099
    %v1207 = vpack.c.b16 %v1102, %v1101
    %v1208 = vpack.c.b16 %v1104, %v1103
    %v1209 = vpack.c.b16 %v1106, %v1105
    %v1210 = vpack.c.b16 %v1108, %v1107
    %v1211 = vpack.c.b16 %v1110, %v1109
    %v1212 = vpack.c.b16 %v1112, %v1111
    %v1213 = vpack.c.b16 %v1114, %v1113
    %v1214 = vpack.c.b16 %v1116, %v1115
    %v1215 = vpack.c.b16 %v1118, %v1117
    %v1216 = vpack.c.b16 %v1120, %v1119
    %v1217 = vpack.c.b16 %v1122, %v1121
    %v1218 = vpack.c.b16 %v1124, %v1123
    %v1219 = vpack.c.b16 %v1126, %v1125
    %v1220 = vpack.c.b16 %v1128, %v1127
    %v1221 = vpack.c.b16 %v1130, %v1129
    %v1222 = vpack.c.b16 %v1132, %v1131
    %v1223 = vpack.c.b16 %v1134, %v1133
    %v1224 = vpack.c.b16 %v1136, %v1135
    %v1225 = vpack.c.b16 %v1138, %v1137
    %v1226 = vpack.c.b16 %v1140, %v1139
    %v1227 = vpack.c.b16 %v1142, %v1141
    %v1228 = vpack.c.b16 %v1144, %v1143
    %v1229 = vpack.c.b16 %v1146, %v1145
    %v1230 = vpack.c.b16 %v1148, %v1147
    %v1231 = vpack.c.b16 %v1150, %v1149
    %v1232 = vpack.c.b16 %v1152, %v1151
    %v1233 = vpack.c.b16 %v1154, %v1153
    %v1234 = vpack.c.b16 %v1156, %v1155
    %v1235 = vpack.c.b16 %v1158, %v1157
    %v1236 = vpack.c.b16 %v1160, %v1159
    %v1237 = vpack.c.b16 %v1162, %v1161
    %v1238 = vpack.c.b16 %v1164, %v1163
    %v1239 = vpack.c.b16 %v1166, %v1165
    %v1240 = vpack.c.b16 %v1168, %v1167
    %v1241 = vpack.c.b16 %v1170, %v1169
    %v1242 = vpack.c.b16 %v1172, %v1171
    %v1243 = vpack.c.b16 %v1174, %v1173
    %v1244 = vpack.c.b16 %v1176, %v1175
    %v1245 = vpack.c.b16 %v1178, %v1177
    %v1246 = vpack.c.b16 %v1180, %v1179
    %v1247 = vpack.c.b16 %v1182, %v1181
    %v1248 = vpack.c.b16 %v1184, %v1183
    %1313 = vmatprep.subr.bf16.mxu0 0
    %1314 = vmatpush1.bf16.msra.mxu0 %v1185
    %1315 = vmatprep.subr.bf16.mxu0 0
    %1316 = vmatpush1.bf16.msra.mxu0 %v1186
    %1317 = vmatprep.subr.bf16.mxu0 0
    %1318 = vmatpush1.bf16.msra.mxu0 %v1187
    %1319 = vmatprep.subr.bf16.mxu0 0
    %1320 = vmatpush1.bf16.msra.mxu0 %v1188
    %1321 = vmatprep.subr.bf16.mxu0 0
    %1322 = vmatpush1.bf16.msra.mxu0 %v1189
    %1323 = vmatprep.subr.bf16.mxu0 0
    %1324 = vmatpush1.bf16.msra.mxu0 %v1190
    %1325 = vmatprep.subr.bf16.mxu0 0
    %1326 = vmatpush1.bf16.msra.mxu0 %v1191
    %1327 = vmatprep.subr.bf16.mxu0 0
    %1328 = vmatpush1.bf16.msra.mxu0 %v1192
    %1329 = vmatprep.subr.bf16.mxu0 0
    %1330 = vmatpush1.bf16.msra.mxu0 %v1193
    %1331 = vmatprep.subr.bf16.mxu0 0
    %1332 = vmatpush1.bf16.msra.mxu0 %v1194
    %1333 = vmatprep.subr.bf16.mxu0 0
    %1334 = vmatpush1.bf16.msra.mxu0 %v1195
    %1335 = vmatprep.subr.bf16.mxu0 0
    %1336 = vmatpush1.bf16.msra.mxu0 %v1196
    %1337 = vmatprep.subr.bf16.mxu0 0
    %1338 = vmatpush1.bf16.msra.mxu0 %v1197
    %1339 = vmatprep.subr.bf16.mxu0 0
    %1340 = vmatpush1.bf16.msra.mxu0 %v1198
    %1341 = vmatprep.subr.bf16.mxu0 0
    %1342 = vmatpush1.bf16.msra.mxu0 %v1199
    %1343 = vmatprep.subr.bf16.mxu0 0
    %1344 = vmatpush1.bf16.msra.mxu0 %v1200
    %1345 = vmatprep.mubr.bf16.mxu0 %v94
    %1346 = vmatmul.mubr.bf16.gmra.mrb[0].mxu0 %v93
    %v1347 = vpop.f32.mrb[0].mxu0
    %v1348 = vadd.f32 %v923, %v1347
    %v1349 = vpop.f32.mrb[0].mxu0
    %v1350 = vpop.f32.mrb[0].mxu0
    %v1351 = vadd.f32 %v926, %v1350
    %v1352 = vpop.f32.mrb[0].mxu0
    %1353 = vdwg.mxu0
    %1354 = vmatprep.subr.bf16.mxu0 0
    %1355 = vmatpush1.bf16.msra.mxu0 %v1201
    %1356 = vmatprep.subr.bf16.mxu0 0
    %1357 = vmatpush1.bf16.msra.mxu0 %v1202
    %1358 = vmatprep.subr.bf16.mxu0 0
    %1359 = vmatpush1.bf16.msra.mxu0 %v1203
    %1360 = vmatprep.subr.bf16.mxu0 0
    %1361 = vmatpush1.bf16.msra.mxu0 %v1204
    %1362 = vmatprep.subr.bf16.mxu0 0
    %1363 = vmatpush1.bf16.msra.mxu0 %v1205
    %1364 = vmatprep.subr.bf16.mxu0 0
    %1365 = vmatpush1.bf16.msra.mxu0 %v1206
    %1366 = vmatprep.subr.bf16.mxu0 0
    %1367 = vmatpush1.bf16.msra.mxu0 %v1207
    %1368 = vmatprep.subr.bf16.mxu0 0
    %1369 = vmatpush1.bf16.msra.mxu0 %v1208
    %1370 = vmatprep.subr.bf16.mxu0 0
    %1371 = vmatpush1.bf16.msra.mxu0 %v1209
    %1372 = vmatprep.subr.bf16.mxu0 0
    %1373 = vmatpush1.bf16.msra.mxu0 %v1210
    %1374 = vmatprep.subr.bf16.mxu0 0
    %1375 = vmatpush1.bf16.msra.mxu0 %v1211
    %1376 = vmatprep.subr.bf16.mxu0 0
    %1377 = vmatpush1.bf16.msra.mxu0 %v1212
    %1378 = vmatprep.subr.bf16.mxu0 0
    %1379 = vmatpush1.bf16.msra.mxu0 %v1213
    %1380 = vmatprep.subr.bf16.mxu0 0
    %1381 = vmatpush1.bf16.msra.mxu0 %v1214
    %1382 = vmatprep.subr.bf16.mxu0 0
    %1383 = vmatpush1.bf16.msra.mxu0 %v1215
    %1384 = vmatprep.subr.bf16.mxu0 0
    %1385 = vmatpush1.bf16.msra.mxu0 %v1216
    %1386 = vmatprep.mubr.bf16.mxu0 %v96
    %1387 = vmatmul.mubr.bf16.gmra.mrb[0].mxu0 %v95
    %v1388 = vpop.f32.mrb[0].mxu0
    %v1389 = vadd.f32 %v1348, %v1388
    %v1390 = vpop.f32.mrb[0].mxu0
    %v1391 = vpop.f32.mrb[0].mxu0
    %v1392 = vadd.f32 %v1351, %v1391
    %v1393 = vpop.f32.mrb[0].mxu0
    %1394 = vdwg.mxu0
    %1395 = vmatprep.subr.bf16.mxu0 0
    %1396 = vmatpush1.bf16.msra.mxu0 %v1217
    %1397 = vmatprep.subr.bf16.mxu0 0
    %1398 = vmatpush1.bf16.msra.mxu0 %v1218
    %1399 = vmatprep.subr.bf16.mxu0 0
    %1400 = vmatpush1.bf16.msra.mxu0 %v1219
    %1401 = vmatprep.subr.bf16.mxu0 0
    %1402 = vmatpush1.bf16.msra.mxu0 %v1220
    %1403 = vmatprep.subr.bf16.mxu0 0
    %1404 = vmatpush1.bf16.msra.mxu0 %v1221
    %1405 = vmatprep.subr.bf16.mxu0 0
    %1406 = vmatpush1.bf16.msra.mxu0 %v1222
    %1407 = vmatprep.subr.bf16.mxu0 0
    %1408 = vmatpush1.bf16.msra.mxu0 %v1223
    %1409 = vmatprep.subr.bf16.mxu0 0
    %1410 = vmatpush1.bf16.msra.mxu0 %v1224
    %1411 = vmatprep.subr.bf16.mxu0 0
    %1412 = vmatpush1.bf16.msra.mxu0 %v1225
    %1413 = vmatprep.subr.bf16.mxu0 0
    %1414 = vmatpush1.bf16.msra.mxu0 %v1226
    %1415 = vmatprep.subr.bf16.mxu0 0
    %1416 = vmatpush1.bf16.msra.mxu0 %v1227
    %1417 = vmatprep.subr.bf16.mxu0 0
    %1418 = vmatpush1.bf16.msra.mxu0 %v1228
    %1419 = vmatprep.subr.bf16.mxu0 0
    %1420 = vmatpush1.bf16.msra.mxu0 %v1229
    %1421 = vmatprep.subr.bf16.mxu0 0
    %1422 = vmatpush1.bf16.msra.mxu0 %v1230
    %1423 = vmatprep.subr.bf16.mxu0 0
    %1424 = vmatpush1.bf16.msra.mxu0 %v1231
    %1425 = vmatprep.subr.bf16.mxu0 0
    %1426 = vmatpush1.bf16.msra.mxu0 %v1232
    %1427 = vmatprep.mubr.bf16.mxu0 %v98
    %1428 = vmatmul.mubr.bf16.gmra.mrb[0].mxu0 %v97
    %v1429 = vpop.f32.mrb[0].mxu0
    %v1430 = vadd.f32 %v1389, %v1429
    %v1431 = vpop.f32.mrb[0].mxu0
    %v1432 = vpop.f32.mrb[0].mxu0
    %v1433 = vadd.f32 %v1392, %v1432
    %v1434 = vpop.f32.mrb[0].mxu0
    %1435 = vdwg.mxu0
    %1436 = vmatprep.subr.bf16.mxu0 0
    %1437 = vmatpush1.bf16.msra.mxu0 %v1233
    %1438 = vmatprep.subr.bf16.mxu0 0
    %1439 = vmatpush1.bf16.msra.mxu0 %v1234
    %1440 = vmatprep.subr.bf16.mxu0 0
    %1441 = vmatpush1.bf16.msra.mxu0 %v1235
    %1442 = vmatprep.subr.bf16.mxu0 0
    %1443 = vmatpush1.bf16.msra.mxu0 %v1236
    %1444 = vmatprep.subr.bf16.mxu0 0
    %1445 = vmatpush1.bf16.msra.mxu0 %v1237
    %1446 = vmatprep.subr.bf16.mxu0 0
    %1447 = vmatpush1.bf16.msra.mxu0 %v1238
    %1448 = vmatprep.subr.bf16.mxu0 0
    %1449 = vmatpush1.bf16.msra.mxu0 %v1239
    %1450 = vmatprep.subr.bf16.mxu0 0
    %1451 = vmatpush1.bf16.msra.mxu0 %v1240
    %1452 = vmatprep.subr.bf16.mxu0 0
    %1453 = vmatpush1.bf16.msra.mxu0 %v1241
    %1454 = vmatprep.subr.bf16.mxu0 0
    %1455 = vmatpush1.bf16.msra.mxu0 %v1242
    %1456 = vmatprep.subr.bf16.mxu0 0
    %1457 = vmatpush1.bf16.msra.mxu0 %v1243
    %1458 = vmatprep.subr.bf16.mxu0 0
    %1459 = vmatpush1.bf16.msra.mxu0 %v1244
    %1460 = vmatprep.subr.bf16.mxu0 0
    %1461 = vmatpush1.bf16.msra.mxu0 %v1245
    %1462 = vmatprep.subr.bf16.mxu0 0
    %1463 = vmatpush1.bf16.msra.mxu0 %v1246
    %1464 = vmatprep.subr.bf16.mxu0 0
    %1465 = vmatpush1.bf16.msra.mxu0 %v1247
    %1466 = vmatprep.subr.bf16.mxu0 0
    %1467 = vmatpush1.bf16.msra.mxu0 %v1248
    %1468 = vmatprep.mubr.bf16.mxu0 %v100
    %1469 = vmatmul.mubr.bf16.gmra.mrb[0].mxu0 %v99
    %v1470 = vpop.f32.mrb[0].mxu0
    %v1471 = vadd.f32 %v1430, %v1470
    %v1472 = vpop.f32.mrb[0].mxu0
    %v1473 = vpop.f32.mrb[0].mxu0
    %v1474 = vadd.f32 %v1433, %v1473
    %v1475 = vpop.f32.mrb[0].mxu0
    %1476 = vdwg.mxu0
    %v1477 = vld [vmem:[%s4] sm:$0x1]
    %v1479 = vlaneseq
    %v1480 = vshrl.u32 %v1479, 7
    %v1481 = vsub.s32 0, %v1480
    %v1482 = vrot.slane %v1477, %v1481
    %v1484 = vadd.f32 %v1471, %v1482
    %v1485 = vadd.f32 %v1474, %v1482
    %v1486 = vmax.f32 %v1484, 0.0
    %v1487 = vmax.f32 %v1485, 0.0
    %1488 = vst [vmem:[#allocation10] sm:$0xff] %v1486
    %1489 = vst [vmem:[#allocation10 + $0x8] sm:$0xff] %v1487
    // Predicated region
    $region38: #{tpu_custom_call.1} parent=1 // pred_check
      _
    $region39: #{tpu_custom_call.1} parent=1 // pred_check_branch
      %1491 = sbr.rel (0) target = $region41
    $region40: #{tpu_custom_call.1} parent=1 // pred_region
      %s1493 = ssub.s32 256, 256
      %1494 = vsyncadd [#allocation4], %s1493
      %s1495 = sshll.u32 [#allocation10], 4
      %s1496 = int_to_ptr.vmem [resolvable:$true] %s1495
      %1501 = dma.vmem_to_hbm [thread:$0]  %s1496, 256, %s5, [#allocation4], 128, 128, 8
    $region41: #{tpu_custom_call.1} parent=1 // pred_fallthru
      _
    // Predicated region
    $region42: #{tpu_custom_call.1} parent=1 // pred_check
      _
    $region43: #{tpu_custom_call.1} parent=1 // pred_check_branch
      %1503 = sbr.rel (0) target = $region45
    $region44: #{tpu_custom_call.1} parent=1 // pred_region
      %1504 = dma.done [#allocation4], 256
    $region45: #{tpu_custom_call.1} parent=1 // pred_fallthru
      _
    %1505 = vsyncpa [#allocation3], 1
    %1506 = vsyncpa [#allocation6], 1
    %1507 = vsyncpa [#allocation9], 1
    %1508 = vsyncpa [#allocation4], 1

</llo_original>
